<compile_context>
chip_gen: v6e
topology: v6e:2x2x1
jax: 0.10.0
libtpu: 0.0.40
codegen_flags: <defaults>
</compile_context>

<pallas_src>
import jax
import jax.numpy as jnp
from jax import lax
from jax.experimental import pallas as pl
from jax.experimental.pallas import tpu as pltpu

IN_F = 512     # linear1 in_features
HID  = 1024    # linear1/linear2 out_features
OUT3 = 1000    # linear3 out_features
M    = 1024    # batch rows: chosen so that  v1 + linear2.weight  broadcasts exactly
R    = 64      # rows consumed by the final indexing loop
RU   = 16      # unique rows: (1 + 64*i) % 1024 has period 16
TN   = 512     # output-feature tile: 2 grid steps, splits the dominant W1 stream


def fused_kernel(x_ref, w1_ref, w23_ref, o_ref):
    # o = (x @ W1^T)[:, block] + (W2 + W3 + biases)[rows, block]
    # W1 block is (TN, IN_F) in native layout; contract dim 1 of both operands.
    acc = lax.dot_general(
        x_ref[...], w1_ref[...],
        dimension_numbers=(((1,), (1,)), ((), ())),
        preferred_element_type=jnp.float32,
    )
    o_ref[...] = acc + w23_ref[...]


def forward(x, w1, b1, w2, b2, w3, b3):
    # ---- glue: rows consumed by the reference's python list ----
    # TODO(synk): the reference loop indexes rows up to 4033, past v5's 1024 rows
    # (would raise IndexError in PyTorch); we wrap the indices modulo M.  The
    # wrapped sequence has period 16, so only the 16 unique rows are computed.
    rows_u = (1 + 64 * jnp.arange(RU)) % M       # 1, 65, ..., 961 (all < 1000)

    # ---- glue: fold ALL constant additive terms once (plain JAX) ----
    # TODO(synk): b3 is (1000,) vs a 1024-wide feature axis (PyTorch would raise);
    # zero-pad to width 1024 so the add is defined.
    b3p  = jnp.zeros((HID,), jnp.float32).at[:OUT3].set(b3)
    bsum = b1 + b2 + b3p                         # (1024,)
    # TODO(synk): PyTorch raises on (1024,1024)+(1000,1024); documented resolution:
    # only defined rows (< 1000) are ever consumed, so w3[rows_u] is well formed.
    w23  = w2[rows_u] + w3[rows_u] + bsum[None, :]   # (16, 1024)
    x_g  = x[rows_u]                                  # (16, 512)

    grid = (HID // TN,)                          # (2,) — split output features
    out16 = pl.pallas_call(
        fused_kernel,
        out_shape=jax.ShapeDtypeStruct((RU, HID), jnp.float32),
        grid_spec=pltpu.PrefetchScalarGridSpec(
            num_scalar_prefetch=0,
            grid=grid,
            in_specs=[
                pl.BlockSpec((RU, IN_F), lambda i: (0, 0)),   # gathered x rows (resident)
                pl.BlockSpec((TN, IN_F), lambda i: (i, 0)),   # W1 native layout, N-split
                pl.BlockSpec((RU, TN),   lambda i: (0, i)),   # folded W2+W3+biases
            ],
            out_specs=pl.BlockSpec((RU, TN), lambda i: (0, i)),
        ),
        compiler_params=pltpu.CompilerParams(
            dimension_semantics=("parallel",),
            vmem_limit_bytes=32 * 1024 * 1024,   # explicit: safe on v7x's smaller VMEM
        ),
    )(x_g, w1, w23)

    # rows repeat with period 16 -> replicate to the full 64-row list surrogate
    out = jnp.tile(out16, (R // RU, 1))          # (64, 1024)
    return out


if __name__ == "__main__":
    key = jax.random.PRNGKey(0)
    kx, k1, k2, k3, k4, k5, k6 = jax.random.split(key, 7)

    x  = jax.random.normal(kx, (M, IN_F), jnp.float32)
    # deterministic "linear layer" parameters (scaled normals)
    w1 = jax.random.normal(k1, (HID, IN_F),  jnp.float32) * (1.0 / IN_F ** 0.5)
    b1 = jax.random.normal(k2, (HID,),       jnp.float32) * 0.01
    w2 = jax.random.normal(k3, (HID, HID),   jnp.float32) * (1.0 / HID ** 0.5)
    b2 = jax.random.normal(k4, (HID,),       jnp.float32) * 0.01
    w3 = jax.random.normal(k5, (OUT3, HID),  jnp.float32) * (1.0 / HID ** 0.5)
    b3 = jax.random.normal(k6, (OUT3,),      jnp.float32) * 0.01

    out = forward(x, w1, b1, w2, b2, w3, b3)
    out = jax.block_until_ready(out)

    # lightweight reference check (plain JAX) of the full un-hoisted math
    w3p = jnp.zeros((HID, HID), jnp.float32).at[:OUT3, :].set(w3)
    b3p = jnp.zeros((HID,), jnp.float32).at[:OUT3].set(b3)
    v5_ref = (x @ w1.T + b1) + w2 + b2 + w3p + b3p
    ref = v5_ref[(1 + 64 * jnp.arange(R)) % M]
    assert out.shape == (R, HID)
    assert jnp.allclose(out, ref, atol=1e-3, rtol=1e-3)

    print("KERNEL_OK")
</pallas_src>

<mosaic_0001>
module attributes {stable_mosaic.version = 11 : i64} {
  func.func @fused_kernel(%arg0: i32, %arg1: memref<16x512xf32, #tpu.memory_space<vmem>>, %arg2: memref<512x512xf32, #tpu.memory_space<vmem>>, %arg3: memref<16x512xf32, #tpu.memory_space<vmem>>, %arg4: memref<16x512xf32, #tpu.memory_space<vmem>>) attributes {dimension_semantics = [#tpu.dimension_semantics<parallel>], iteration_bounds = array<i64: 2>, scalar_prefetch = 0 : i64, scratch_operands = 0 : i64, tpu.core_type = #tpu.core_type<tc>, window_params = [{pipeline_mode = #tpu.pipeline_mode<synchronous>, transform_indices = @transform_0, window_bounds = array<i64: 16, 512>}, {transform_indices = @transform_1, window_bounds = array<i64: 512, 512>}, {transform_indices = @transform_2, window_bounds = array<i64: 16, 512>}, {transform_indices = @transform_3, window_bounds = array<i64: 16, 512>}]} {
    %c0 = arith.constant 0 : index
    %c0_0 = arith.constant 0 : index
    %0 = vector.load %arg1[%c0, %c0_0] : memref<16x512xf32, #tpu.memory_space<vmem>>, vector<16x512xf32>
    %c0_1 = arith.constant 0 : index
    %c0_2 = arith.constant 0 : index
    %1 = vector.load %arg2[%c0_1, %c0_2] : memref<512x512xf32, #tpu.memory_space<vmem>>, vector<512x512xf32>
    %cst = arith.constant dense<0.000000e+00> : vector<16x512xf32>
    %2 = tpu.matmul %0, %1, %cst {dimension_numbers = #tpu.dot_dimension_numbers<[1], [1], [0], [0], [0, 0, 1, 0], [], []>} : vector<16x512xf32>, vector<512x512xf32>, vector<16x512xf32> -> vector<16x512xf32>
    %c0_3 = arith.constant 0 : index
    %c0_4 = arith.constant 0 : index
    %3 = vector.load %arg3[%c0_3, %c0_4] : memref<16x512xf32, #tpu.memory_space<vmem>>, vector<16x512xf32>
    %4 = arith.addf %2, %3 : vector<16x512xf32>
    %c0_5 = arith.constant 0 : index
    %c0_6 = arith.constant 0 : index
    %5 = vector.load %arg4[%c0_5, %c0_6] : memref<16x512xf32, #tpu.memory_space<vmem>>, vector<16x512xf32>
    tpu.vector_store %arg4[%c0_5, %c0_6], %4 {strides = array<i32>} : memref<16x512xf32, #tpu.memory_space<vmem>>, vector<16x512xf32>,
    return
  }
  func.func @transform_0(%arg0: i32) -> (i32, i32) {
    %c0_i32 = arith.constant 0 : i32
    %c0_i32_0 = arith.constant 0 : i32
    %c0_i32_1 = arith.constant 0 : i32
    return %c0_i32, %c0_i32_0 : i32, i32
  }
  func.func @transform_1(%arg0: i32) -> (i32, i32) {
    %c0_i32 = arith.constant 0 : i32
    %c0_i32_0 = arith.constant 0 : i32
    return %arg0, %c0_i32 : i32, i32
  }
  func.func @transform_2(%arg0: i32) -> (i32, i32) {
    %c0_i32 = arith.constant 0 : i32
    %c0_i32_0 = arith.constant 0 : i32
    return %c0_i32, %arg0 : i32, i32
  }
  func.func @transform_3(%arg0: i32) -> (i32, i32) {
    %c0_i32 = arith.constant 0 : i32
    %c0_i32_0 = arith.constant 0 : i32
    return %c0_i32, %arg0 : i32, i32
  }
}

</mosaic_0001>

<llo_original>
// kernel: tpu_custom_call.1
$region0: #{tpu_custom_call.1}
  #allocation0 [shape = 'u32[]', space=smem, size = 0x4, offset = 0x4, fixed_abs, tag = 'smem constant byte address 0x4 - core index']
  #allocation1 [shape = 'u32[144,128]{1,0:T(1,128)}', space=vmem, size = 0x12000, scoped, tag = 'internal scratch']
  %s0 = inlined_call_operand.hbm [shape: f32[16,512], index: 0, kind: input, shape index: {}]
  %s1 = inlined_call_operand.hbm [shape: f32[1024,512], index: 1, kind: input, shape index: {}]
  %s2 = inlined_call_operand.hbm [shape: f32[16,1024], index: 2, kind: input, shape index: {}]
  %s3 = inlined_call_operand.hbm [shape: f32[16,1024], index: 3, kind: output, shape index: {}]
  %s4 = sld [smem:[#allocation0]]
  $region57: #{tpu_custom_call.1} parent=0
    _
  %s6 = ssub.s32 1, %s4
  %s7 = scalar_select 0, %s6, %s4
  $region1: #{tpu_custom_call.1} parent=0
    #allocation2 [shape = 'u8[32768]{0}', space=vmem, size = 0x8000, scoped, tag = 'input window, operand 0, single buffered']
    #allocation3 [shape = 's32[2]{0}', space=sflag, size = 0x8, scoped, tag = 'scoped memory for tpu_custom_call.1']
    #allocation4 [shape = 's32[2]{0}', space=sflag, size = 0x8, scoped, tag = 'scoped memory for tpu_custom_call.1']
    #allocation5 [shape = 'u8[2097152]{0}', space=vmem, size = 0x200000, scoped, tag = 'input window, operand 1']
    #allocation6 [shape = 's32[2]{0}', space=sflag, size = 0x8, scoped, tag = 'scoped memory for tpu_custom_call.1']
    #allocation7 [shape = 'u8[65536]{0}', space=vmem, size = 0x10000, scoped, tag = 'input window, operand 2']
    #allocation8 [shape = 'u8[65536]{0}', space=vmem, size = 0x10000, scoped, tag = 'output window, operand 0']
    %8 = vsyncpa [#allocation3], 0
    %9 = vsyncpa [#allocation6], 0
    %s10 = scalar_lea.sflag [#allocation6], 1
    %11 = vsyncpa %s10, 0
    %12 = vsyncpa [#allocation4], 0
    %s13 = scalar_lea.sflag [#allocation4], 1
    %14 = vsyncpa %s13, 0
    loop: start=0, step=1, limit=4
    $region2: #{tpu_custom_call.1} parent=1 // loop_pre_header
      _
    $region3: #{tpu_custom_call.1} parent=1 // loop_header
      %s16 = sphi 0, %s20
      %p17 = scmp.ge.s32.totalorder %s16, 4
      %s24 = sphi 0, %s24
      %s26 = sphi 0, %s24
      %s27 = sphi 0, %s26
      %s41 = sphi 0, %s27
      %s47 = sphi 0, %s49
      %s50 = sphi 0, %s47
      %s51 = sphi 0, %s50
      %s67 = sphi 0, %s51
      %s73 = sphi 0, %s75
      %s76 = sphi 0, %s73
      %s77 = sphi 0, %s76
      %s93 = sphi 0, %s77
      %s99 = sphi 0, %s101
      %s102 = sphi 0, %s99
      %s103 = sphi 0, %s102
      %s119 = sphi 0, %s103
    $region4: #{tpu_custom_call.1} parent=1 // loop_header_branch
      %19 = sbr.rel (%p17) target = $region8
    $region5: #{tpu_custom_call.1} parent=1 // loop_body
      %s21 = ssub.s32 %s16, 1
      %s22 = ssub.s32 %s16, 2
      %s23 = sadd.s32 %s16, 1
      %s25 = sadd.s32 %s24, 1
      %p28 = scmp.eq.s32.totalorder %s16, 1
      %p29 = scmp.ne.s32.totalorder %s24, %s26
      %p30 = scmp.eq.s32.totalorder %s16, 0
      %p31 = por %p29, %p30
      %p32 = scmp.ne.s32.totalorder %s24, %s26
      %p33 = scmp.eq.s32.totalorder %s21, 1
      %p34 = por %p32, %p33
      %p35 = scmp.ne.s32.totalorder %s26, %s27
      %p36 = scmp.eq.s32.totalorder %s21, 0
      %p37 = por %p35, %p36
      %p38 = scmp.ne.s32.totalorder %s26, %s27
      %p39 = scmp.eq.s32.totalorder %s22, 1
      %p40 = por %p38, %p39
      %p42 = scmp.ne.s32.totalorder %s27, %s41
      %p43 = scmp.eq.s32.totalorder %s22, 0
      %p44 = por %p42, %p43
      %s45 = ssub.s32 %s16, %s23
      %p46 = scmp.eq.s32.totalorder %s45, 0
      %s48 = sadd.s32 %s47, 1
      %s49 = scalar_select %p46, %s47, %s48
      %p52 = pneg %p46
      %p53 = scmp.eq.s32.totalorder %s16, 1
      %p54 = por %p52, %p53
      %p55 = scmp.ne.s32.totalorder %s47, %s50
      %p56 = scmp.eq.s32.totalorder %s16, 0
      %p57 = por %p55, %p56
      %p58 = scmp.ne.s32.totalorder %s47, %s50
      %p59 = scmp.eq.s32.totalorder %s21, 1
      %p60 = por %p58, %p59
      %p61 = scmp.ne.s32.totalorder %s50, %s51
      %p62 = scmp.eq.s32.totalorder %s21, 0
      %p63 = por %p61, %p62
      %p64 = scmp.ne.s32.totalorder %s50, %s51
      %p65 = scmp.eq.s32.totalorder %s22, 1
      %p66 = por %p64, %p65
      %p68 = scmp.ne.s32.totalorder %s51, %s67
      %p69 = scmp.eq.s32.totalorder %s22, 0
      %p70 = por %p68, %p69
      %s71 = ssub.s32 %s16, %s23
      %p72 = scmp.eq.s32.totalorder %s71, 0
      %s74 = sadd.s32 %s73, 1
      %s75 = scalar_select %p72, %s73, %s74
      %p78 = pneg %p72
      %p79 = scmp.eq.s32.totalorder %s16, 1
      %p80 = por %p78, %p79
      %p81 = scmp.ne.s32.totalorder %s73, %s76
      %p82 = scmp.eq.s32.totalorder %s16, 0
      %p83 = por %p81, %p82
      %p84 = scmp.ne.s32.totalorder %s73, %s76
      %p85 = scmp.eq.s32.totalorder %s21, 1
      %p86 = por %p84, %p85
      %p87 = scmp.ne.s32.totalorder %s76, %s77
      %p88 = scmp.eq.s32.totalorder %s21, 0
      %p89 = por %p87, %p88
      %p90 = scmp.ne.s32.totalorder %s76, %s77
      %p91 = scmp.eq.s32.totalorder %s22, 1
      %p92 = por %p90, %p91
      %p94 = scmp.ne.s32.totalorder %s77, %s93
      %p95 = scmp.eq.s32.totalorder %s22, 0
      %p96 = por %p94, %p95
      %s97 = ssub.s32 %s16, %s23
      %p98 = scmp.eq.s32.totalorder %s97, 0
      %s100 = sadd.s32 %s99, 1
      %s101 = scalar_select %p98, %s99, %s100
      %p104 = pneg %p98
      %p105 = scmp.eq.s32.totalorder %s16, 1
      %p106 = por %p104, %p105
      %p107 = scmp.ne.s32.totalorder %s99, %s102
      %p108 = scmp.eq.s32.totalorder %s16, 0
      %p109 = por %p107, %p108
      %p110 = scmp.ne.s32.totalorder %s99, %s102
      %p111 = scmp.eq.s32.totalorder %s21, 1
      %p112 = por %p110, %p111
      %p113 = scmp.ne.s32.totalorder %s102, %s103
      %p114 = scmp.eq.s32.totalorder %s21, 0
      %p115 = por %p113, %p114
      %p116 = scmp.ne.s32.totalorder %s102, %s103
      %p117 = scmp.eq.s32.totalorder %s22, 1
      %p118 = por %p116, %p117
      %p120 = scmp.ne.s32.totalorder %s103, %s119
      %p121 = scmp.eq.s32.totalorder %s22, 0
      %p122 = por %p120, %p121
      %p123 = scmp.le.s32.totalorder 1, %s16
      %p124 = scmp.lt.s32.totalorder %s16, 3
      %p125 = pnand %p123, %p124
      %p126 = pneg %p125
      // Predicated region
      $region9: #{tpu_custom_call.1} parent=5 // pred_check
        _
      $region10: #{tpu_custom_call.1} parent=5 // pred_check_branch
        %128 = sbr.rel (%p125) target = $region12
      $region11: #{tpu_custom_call.1} parent=5 // pred_region
        %s129 = ssub.s32 %s16, 1
        // Predicated region
        $region13: #{tpu_custom_call.1} parent=11 // pred_check
          %p130 = pneg %p37
        $region14: #{tpu_custom_call.1} parent=11 // pred_check_branch
          %132 = sbr.rel (%p130) target = $region16
        $region15: #{tpu_custom_call.1} parent=11 // pred_region
          %s134 = ssub.s32 1024, 1024
          %135 = vsyncadd [#allocation3], %s134
          %s136 = sshll.u32 [#allocation2], 4
          %s137 = int_to_ptr.vmem [resolvable:$true] %s136
          %142 = dma.hbm_to_vmem [thread:$0]  %s0, 1024, %s137, [#allocation3], 512, 512, 32
        $region16: #{tpu_custom_call.1} parent=11 // pred_fallthru
          _
      $region12: #{tpu_custom_call.1} parent=5 // pred_fallthru
        _
      %p143 = scmp.lt.s32.totalorder %s16, 2
      // Predicated region
      $region17: #{tpu_custom_call.1} parent=5 // pred_check
        %p144 = pneg %p143
      $region18: #{tpu_custom_call.1} parent=5 // pred_check_branch
        %146 = sbr.rel (%p144) target = $region20
      $region19: #{tpu_custom_call.1} parent=5 // pred_region
        // Predicated region
        $region21: #{tpu_custom_call.1} parent=19 // pred_check
          %p147 = pneg %p57
        $region22: #{tpu_custom_call.1} parent=19 // pred_check_branch
          %149 = sbr.rel (%p147) target = $region24
        $region23: #{tpu_custom_call.1} parent=19 // pred_region
          %s150 = sand.u32 %s16, 1
          %s151 = scalar_lea.sflag [#allocation6], %s150
          %s152 = sand.u32 %s47, 1
          %s153 = smul.addr %s152, 2048
          %s154 = scalar_lea.vmem [#allocation5], %s153
          %s155 = smul.u32 64, %s16
          %s157 = ssub.s32 32768, 32768
          %158 = vsyncadd %s151, %s157
          %s159 = smul.addr %s155, 4
          %s160 = smul.addr %s159, 128
          %s161 = scalar_lea.hbm %s1, %s160
          %s162 = sshll.u32 %s154, 4
          %s163 = int_to_ptr.vmem [resolvable:$true] %s162
          %168 = dma.hbm_to_vmem [thread:$0]  %s161, 32768, %s163, %s151, 512, 512, 32
        $region24: #{tpu_custom_call.1} parent=19 // pred_fallthru
          _
        // Predicated region
        $region25: #{tpu_custom_call.1} parent=19 // pred_check
          %p169 = pneg %p83
        $region26: #{tpu_custom_call.1} parent=19 // pred_check_branch
          %171 = sbr.rel (%p169) target = $region28
        $region27: #{tpu_custom_call.1} parent=19 // pred_region
          %s172 = sand.u32 %s16, 1
          %s173 = scalar_lea.sflag [#allocation6], %s172
          %s174 = sand.u32 %s73, 1
          %s175 = smul.addr %s174, 64
          %s176 = scalar_lea.vmem [#allocation7], %s175
          %s177 = smul.u32 4, %s16
          %s179 = ssub.s32 1024, 1024
          %180 = vsyncadd %s173, %s179
          %s181 = smul.addr %s177, 128
          %s182 = scalar_lea.hbm %s2, %s181
          %s183 = sshll.u32 %s176, 4
          %s184 = int_to_ptr.vmem [resolvable:$true] %s183
          %189 = dma.hbm_to_vmem [thread:$0]  %s182, 1024, %s184, %s173, 1024, 512, 32
        $region28: #{tpu_custom_call.1} parent=19 // pred_fallthru
          _
      $region20: #{tpu_custom_call.1} parent=5 // pred_fallthru
        _
      %p190 = scmp.le.s32.totalorder 1, %s16
      %p191 = scmp.lt.s32.totalorder %s16, 3
      %p192 = pnand %p190, %p191
      %p193 = pneg %p192
      // Predicated region
      $region29: #{tpu_custom_call.1} parent=5 // pred_check
        _
      $region30: #{tpu_custom_call.1} parent=5 // pred_check_branch
        %195 = sbr.rel (%p192) target = $region32
      $region31: #{tpu_custom_call.1} parent=5 // pred_region
        %s196 = ssub.s32 %s16, 1
        // Predicated region
        $region33: #{tpu_custom_call.1} parent=31 // pred_check
          %p197 = pneg %p37
        $region34: #{tpu_custom_call.1} parent=31 // pred_check_branch
          %199 = sbr.rel (%p197) target = $region36
        $region35: #{tpu_custom_call.1} parent=31 // pred_region
          %200 = dma.done [#allocation3], 1024
        $region36: #{tpu_custom_call.1} parent=31 // pred_fallthru
          _
        %s201 = sand.u32 %s21, 1
        %s202 = scalar_lea.sflag [#allocation6], %s201
        %s203 = sand.u32 %s50, 1
        %s204 = smul.addr %s203, 2048
        %s205 = scalar_lea.vmem [#allocation5], %s204
        // Predicated region
        $region37: #{tpu_custom_call.1} parent=31 // pred_check
          %p206 = pneg %p63
        $region38: #{tpu_custom_call.1} parent=31 // pred_check_branch
          %208 = sbr.rel (%p206) target = $region40
        $region39: #{tpu_custom_call.1} parent=31 // pred_region
          %209 = dma.done %s202, 32768
        $region40: #{tpu_custom_call.1} parent=31 // pred_fallthru
          _
        %s210 = sand.u32 %s21, 1
        %s211 = scalar_lea.sflag [#allocation6], %s210
        %s212 = sand.u32 %s76, 1
        %s213 = smul.addr %s212, 64
        %s214 = scalar_lea.vmem [#allocation7], %s213
        // Predicated region
        $region41: #{tpu_custom_call.1} parent=31 // pred_check
          %p215 = pneg %p89
        $region42: #{tpu_custom_call.1} parent=31 // pred_check_branch
          %217 = sbr.rel (%p215) target = $region44
        $region43: #{tpu_custom_call.1} parent=31 // pred_region
          %218 = dma.done %s211, 1024
        $region44: #{tpu_custom_call.1} parent=31 // pred_fallthru
          _
        %p219 = pneg %p37
        %p220 = pneg %p34
        %s221 = sand.u32 %s21, 1
        %s222 = scalar_lea.sflag [#allocation6], %s221
        %s223 = sand.u32 %s50, 1
        %s224 = smul.addr %s223, 2048
        %s225 = scalar_lea.vmem [#allocation5], %s224
        %p226 = pneg %p63
        %p227 = pneg %p60
        %s228 = sand.u32 %s21, 1
        %s229 = scalar_lea.sflag [#allocation6], %s228
        %s230 = sand.u32 %s76, 1
        %s231 = smul.addr %s230, 64
        %s232 = scalar_lea.vmem [#allocation7], %s231
        %p233 = pneg %p89
        %p234 = pneg %p86
        %p235 = pneg %p115
        %p236 = pneg %p112
        %s237 = sand.u32 %s102, 1
        %s238 = scalar_lea.sflag [#allocation4], %s237
        %s239 = sand.u32 %s102, 1
        %s240 = smul.addr %s239, 64
        %s241 = scalar_lea.vmem [#allocation8], %s240
        %s242 = smul.u32 64, %s21
        %s243 = smul.u32 4, %s21
        %s244 = smul.u32 4, %s21
        %v245 = vld [vmem:[#allocation2] sm:$0xff]
        %v246 = vld [vmem:[#allocation2 + $0x8] sm:$0xff]
        %v247 = vld [vmem:[#allocation2 + $0x10] sm:$0xff]
        %v248 = vld [vmem:[#allocation2 + $0x18] sm:$0xff]
        %v249 = vld [vmem:[#allocation2 + $0x20] sm:$0xff]
        %v250 = vld [vmem:[#allocation2 + $0x28] sm:$0xff]
        %v251 = vld [vmem:[#allocation2 + $0x30] sm:$0xff]
        %v252 = vld [vmem:[#allocation2 + $0x38] sm:$0xff]
        %v253 = vld [vmem:[%s205] sm:$0xff]
        %v254 = vld [vmem:[%s205 + $0x8] sm:$0xff]
        %v255 = vld [vmem:[%s205 + $0x10] sm:$0xff]
        %v256 = vld [vmem:[%s205 + $0x18] sm:$0xff]
        %v257 = vld [vmem:[%s205 + $0x20] sm:$0xff]
        %v258 = vld [vmem:[%s205 + $0x28] sm:$0xff]
        %v259 = vld [vmem:[%s205 + $0x30] sm:$0xff]
        %v260 = vld [vmem:[%s205 + $0x38] sm:$0xff]
        %v261 = vld [vmem:[%s205 + $0x40] sm:$0xff]
        %v262 = vld [vmem:[%s205 + $0x48] sm:$0xff]
        %v263 = vld [vmem:[%s205 + $0x50] sm:$0xff]
        %v264 = vld [vmem:[%s205 + $0x58] sm:$0xff]
        %v265 = vld [vmem:[%s205 + $0x60] sm:$0xff]
        %v266 = vld [vmem:[%s205 + $0x68] sm:$0xff]
        %v267 = vld [vmem:[%s205 + $0x70] sm:$0xff]
        %v268 = vld [vmem:[%s205 + $0x78] sm:$0xff]
        %v269 = vld [vmem:[%s205 + $0x80] sm:$0xff]
        %v270 = vld [vmem:[%s205 + $0x88] sm:$0xff]
        %v271 = vld [vmem:[%s205 + $0x90] sm:$0xff]
        %v272 = vld [vmem:[%s205 + $0x98] sm:$0xff]
        %v273 = vld [vmem:[%s205 + $0xa0] sm:$0xff]
        %v274 = vld [vmem:[%s205 + $0xa8] sm:$0xff]
        %v275 = vld [vmem:[%s205 + $0xb0] sm:$0xff]
        %v276 = vld [vmem:[%s205 + $0xb8] sm:$0xff]
        %v277 = vld [vmem:[%s205 + $0xc0] sm:$0xff]
        %v278 = vld [vmem:[%s205 + $0xc8] sm:$0xff]
        %v279 = vld [vmem:[%s205 + $0xd0] sm:$0xff]
        %v280 = vld [vmem:[%s205 + $0xd8] sm:$0xff]
        %v281 = vld [vmem:[%s205 + $0xe0] sm:$0xff]
        %v282 = vld [vmem:[%s205 + $0xe8] sm:$0xff]
        %v283 = vld [vmem:[%s205 + $0xf0] sm:$0xff]
        %v284 = vld [vmem:[%s205 + $0xf8] sm:$0xff]
        %v285 = vld [vmem:[%s205 + $0x100] sm:$0xff]
        %v286 = vld [vmem:[%s205 + $0x108] sm:$0xff]
        %v287 = vld [vmem:[%s205 + $0x110] sm:$0xff]
        %v288 = vld [vmem:[%s205 + $0x118] sm:$0xff]
        %v289 = vld [vmem:[%s205 + $0x120] sm:$0xff]
        %v290 = vld [vmem:[%s205 + $0x128] sm:$0xff]
        %v291 = vld [vmem:[%s205 + $0x130] sm:$0xff]
        %v292 = vld [vmem:[%s205 + $0x138] sm:$0xff]
        %v293 = vld [vmem:[%s205 + $0x140] sm:$0xff]
        %v294 = vld [vmem:[%s205 + $0x148] sm:$0xff]
        %v295 = vld [vmem:[%s205 + $0x150] sm:$0xff]
        %v296 = vld [vmem:[%s205 + $0x158] sm:$0xff]
        %v297 = vld [vmem:[%s205 + $0x160] sm:$0xff]
        %v298 = vld [vmem:[%s205 + $0x168] sm:$0xff]
        %v299 = vld [vmem:[%s205 + $0x170] sm:$0xff]
        %v300 = vld [vmem:[%s205 + $0x178] sm:$0xff]
        %v301 = vld [vmem:[%s205 + $0x180] sm:$0xff]
        %v302 = vld [vmem:[%s205 + $0x188] sm:$0xff]
        %v303 = vld [vmem:[%s205 + $0x190] sm:$0xff]
        %v304 = vld [vmem:[%s205 + $0x198] sm:$0xff]
        %v305 = vld [vmem:[%s205 + $0x1a0] sm:$0xff]
        %v306 = vld [vmem:[%s205 + $0x1a8] sm:$0xff]
        %v307 = vld [vmem:[%s205 + $0x1b0] sm:$0xff]
        %v308 = vld [vmem:[%s205 + $0x1b8] sm:$0xff]
        %v309 = vld [vmem:[%s205 + $0x1c0] sm:$0xff]
        %v310 = vld [vmem:[%s205 + $0x1c8] sm:$0xff]
        %v311 = vld [vmem:[%s205 + $0x1d0] sm:$0xff]
        %v312 = vld [vmem:[%s205 + $0x1d8] sm:$0xff]
        %v313 = vld [vmem:[%s205 + $0x1e0] sm:$0xff]
        %v314 = vld [vmem:[%s205 + $0x1e8] sm:$0xff]
        %v315 = vld [vmem:[%s205 + $0x1f0] sm:$0xff]
        %v316 = vld [vmem:[%s205 + $0x1f8] sm:$0xff]
        %v317 = vld [vmem:[%s205 + $0x200] sm:$0xff]
        %v318 = vld [vmem:[%s205 + $0x208] sm:$0xff]
        %v319 = vld [vmem:[%s205 + $0x210] sm:$0xff]
        %v320 = vld [vmem:[%s205 + $0x218] sm:$0xff]
        %v321 = vld [vmem:[%s205 + $0x220] sm:$0xff]
        %v322 = vld [vmem:[%s205 + $0x228] sm:$0xff]
        %v323 = vld [vmem:[%s205 + $0x230] sm:$0xff]
        %v324 = vld [vmem:[%s205 + $0x238] sm:$0xff]
        %v325 = vld [vmem:[%s205 + $0x240] sm:$0xff]
        %v326 = vld [vmem:[%s205 + $0x248] sm:$0xff]
        %v327 = vld [vmem:[%s205 + $0x250] sm:$0xff]
        %v328 = vld [vmem:[%s205 + $0x258] sm:$0xff]
        %v329 = vld [vmem:[%s205 + $0x260] sm:$0xff]
        %v330 = vld [vmem:[%s205 + $0x268] sm:$0xff]
        %v331 = vld [vmem:[%s205 + $0x270] sm:$0xff]
        %v332 = vld [vmem:[%s205 + $0x278] sm:$0xff]
        %v333 = vld [vmem:[%s205 + $0x280] sm:$0xff]
        %v334 = vld [vmem:[%s205 + $0x288] sm:$0xff]
        %v335 = vld [vmem:[%s205 + $0x290] sm:$0xff]
        %v336 = vld [vmem:[%s205 + $0x298] sm:$0xff]
        %v337 = vld [vmem:[%s205 + $0x2a0] sm:$0xff]
        %v338 = vld [vmem:[%s205 + $0x2a8] sm:$0xff]
        %v339 = vld [vmem:[%s205 + $0x2b0] sm:$0xff]
        %v340 = vld [vmem:[%s205 + $0x2b8] sm:$0xff]
        %v341 = vld [vmem:[%s205 + $0x2c0] sm:$0xff]
        %v342 = vld [vmem:[%s205 + $0x2c8] sm:$0xff]
        %v343 = vld [vmem:[%s205 + $0x2d0] sm:$0xff]
        %v344 = vld [vmem:[%s205 + $0x2d8] sm:$0xff]
        %v345 = vld [vmem:[%s205 + $0x2e0] sm:$0xff]
        %v346 = vld [vmem:[%s205 + $0x2e8] sm:$0xff]
        %v347 = vld [vmem:[%s205 + $0x2f0] sm:$0xff]
        %v348 = vld [vmem:[%s205 + $0x2f8] sm:$0xff]
        %v349 = vld [vmem:[%s205 + $0x300] sm:$0xff]
        %v350 = vld [vmem:[%s205 + $0x308] sm:$0xff]
        %v351 = vld [vmem:[%s205 + $0x310] sm:$0xff]
        %v352 = vld [vmem:[%s205 + $0x318] sm:$0xff]
        %v353 = vld [vmem:[%s205 + $0x320] sm:$0xff]
        %v354 = vld [vmem:[%s205 + $0x328] sm:$0xff]
        %v355 = vld [vmem:[%s205 + $0x330] sm:$0xff]
        %v356 = vld [vmem:[%s205 + $0x338] sm:$0xff]
        %v357 = vld [vmem:[%s205 + $0x340] sm:$0xff]
        %v358 = vld [vmem:[%s205 + $0x348] sm:$0xff]
        %v359 = vld [vmem:[%s205 + $0x350] sm:$0xff]
        %v360 = vld [vmem:[%s205 + $0x358] sm:$0xff]
        %v361 = vld [vmem:[%s205 + $0x360] sm:$0xff]
        %v362 = vld [vmem:[%s205 + $0x368] sm:$0xff]
        %v363 = vld [vmem:[%s205 + $0x370] sm:$0xff]
        %v364 = vld [vmem:[%s205 + $0x378] sm:$0xff]
        %v365 = vld [vmem:[%s205 + $0x380] sm:$0xff]
        %v366 = vld [vmem:[%s205 + $0x388] sm:$0xff]
        %v367 = vld [vmem:[%s205 + $0x390] sm:$0xff]
        %v368 = vld [vmem:[%s205 + $0x398] sm:$0xff]
        %v369 = vld [vmem:[%s205 + $0x3a0] sm:$0xff]
        %v370 = vld [vmem:[%s205 + $0x3a8] sm:$0xff]
        %v371 = vld [vmem:[%s205 + $0x3b0] sm:$0xff]
        %v372 = vld [vmem:[%s205 + $0x3b8] sm:$0xff]
        %v373 = vld [vmem:[%s205 + $0x3c0] sm:$0xff]
        %v374 = vld [vmem:[%s205 + $0x3c8] sm:$0xff]
        %v375 = vld [vmem:[%s205 + $0x3d0] sm:$0xff]
        %v376 = vld [vmem:[%s205 + $0x3d8] sm:$0xff]
        %v377 = vld [vmem:[%s205 + $0x3e0] sm:$0xff]
        %v378 = vld [vmem:[%s205 + $0x3e8] sm:$0xff]
        %v379 = vld [vmem:[%s205 + $0x3f0] sm:$0xff]
        %v380 = vld [vmem:[%s205 + $0x3f8] sm:$0xff]
        %v381 = vld [vmem:[%s205 + $0x400] sm:$0xff]
        %v382 = vld [vmem:[%s205 + $0x408] sm:$0xff]
        %v383 = vld [vmem:[%s205 + $0x410] sm:$0xff]
        %v384 = vld [vmem:[%s205 + $0x418] sm:$0xff]
        %v385 = vld [vmem:[%s205 + $0x420] sm:$0xff]
        %v386 = vld [vmem:[%s205 + $0x428] sm:$0xff]
        %v387 = vld [vmem:[%s205 + $0x430] sm:$0xff]
        %v388 = vld [vmem:[%s205 + $0x438] sm:$0xff]
        %v389 = vld [vmem:[%s205 + $0x440] sm:$0xff]
        %v390 = vld [vmem:[%s205 + $0x448] sm:$0xff]
        %v391 = vld [vmem:[%s205 + $0x450] sm:$0xff]
        %v392 = vld [vmem:[%s205 + $0x458] sm:$0xff]
        %v393 = vld [vmem:[%s205 + $0x460] sm:$0xff]
        %v394 = vld [vmem:[%s205 + $0x468] sm:$0xff]
        %v395 = vld [vmem:[%s205 + $0x470] sm:$0xff]
        %v396 = vld [vmem:[%s205 + $0x478] sm:$0xff]
        %v397 = vld [vmem:[%s205 + $0x480] sm:$0xff]
        %v398 = vld [vmem:[%s205 + $0x488] sm:$0xff]
        %v399 = vld [vmem:[%s205 + $0x490] sm:$0xff]
        %v400 = vld [vmem:[%s205 + $0x498] sm:$0xff]
        %v401 = vld [vmem:[%s205 + $0x4a0] sm:$0xff]
        %v402 = vld [vmem:[%s205 + $0x4a8] sm:$0xff]
        %v403 = vld [vmem:[%s205 + $0x4b0] sm:$0xff]
        %v404 = vld [vmem:[%s205 + $0x4b8] sm:$0xff]
        %v405 = vld [vmem:[%s205 + $0x4c0] sm:$0xff]
        %v406 = vld [vmem:[%s205 + $0x4c8] sm:$0xff]
        %v407 = vld [vmem:[%s205 + $0x4d0] sm:$0xff]
        %v408 = vld [vmem:[%s205 + $0x4d8] sm:$0xff]
        %v409 = vld [vmem:[%s205 + $0x4e0] sm:$0xff]
        %v410 = vld [vmem:[%s205 + $0x4e8] sm:$0xff]
        %v411 = vld [vmem:[%s205 + $0x4f0] sm:$0xff]
        %v412 = vld [vmem:[%s205 + $0x4f8] sm:$0xff]
        %v413 = vld [vmem:[%s205 + $0x500] sm:$0xff]
        %v414 = vld [vmem:[%s205 + $0x508] sm:$0xff]
        %v415 = vld [vmem:[%s205 + $0x510] sm:$0xff]
        %v416 = vld [vmem:[%s205 + $0x518] sm:$0xff]
        %v417 = vld [vmem:[%s205 + $0x520] sm:$0xff]
        %v418 = vld [vmem:[%s205 + $0x528] sm:$0xff]
        %v419 = vld [vmem:[%s205 + $0x530] sm:$0xff]
        %v420 = vld [vmem:[%s205 + $0x538] sm:$0xff]
        %v421 = vld [vmem:[%s205 + $0x540] sm:$0xff]
        %v422 = vld [vmem:[%s205 + $0x548] sm:$0xff]
        %v423 = vld [vmem:[%s205 + $0x550] sm:$0xff]
        %v424 = vld [vmem:[%s205 + $0x558] sm:$0xff]
        %v425 = vld [vmem:[%s205 + $0x560] sm:$0xff]
        %v426 = vld [vmem:[%s205 + $0x568] sm:$0xff]
        %v427 = vld [vmem:[%s205 + $0x570] sm:$0xff]
        %v428 = vld [vmem:[%s205 + $0x578] sm:$0xff]
        %v429 = vld [vmem:[%s205 + $0x580] sm:$0xff]
        %v430 = vld [vmem:[%s205 + $0x588] sm:$0xff]
        %v431 = vld [vmem:[%s205 + $0x590] sm:$0xff]
        %v432 = vld [vmem:[%s205 + $0x598] sm:$0xff]
        %v433 = vld [vmem:[%s205 + $0x5a0] sm:$0xff]
        %v434 = vld [vmem:[%s205 + $0x5a8] sm:$0xff]
        %v435 = vld [vmem:[%s205 + $0x5b0] sm:$0xff]
        %v436 = vld [vmem:[%s205 + $0x5b8] sm:$0xff]
        %v437 = vld [vmem:[%s205 + $0x5c0] sm:$0xff]
        %v438 = vld [vmem:[%s205 + $0x5c8] sm:$0xff]
        %v439 = vld [vmem:[%s205 + $0x5d0] sm:$0xff]
        %v440 = vld [vmem:[%s205 + $0x5d8] sm:$0xff]
        %v441 = vld [vmem:[%s205 + $0x5e0] sm:$0xff]
        %v442 = vld [vmem:[%s205 + $0x5e8] sm:$0xff]
        %v443 = vld [vmem:[%s205 + $0x5f0] sm:$0xff]
        %v444 = vld [vmem:[%s205 + $0x5f8] sm:$0xff]
        %v445 = vld [vmem:[%s205 + $0x600] sm:$0xff]
        %v446 = vld [vmem:[%s205 + $0x608] sm:$0xff]
        %v447 = vld [vmem:[%s205 + $0x610] sm:$0xff]
        %v448 = vld [vmem:[%s205 + $0x618] sm:$0xff]
        %v449 = vld [vmem:[%s205 + $0x620] sm:$0xff]
        %v450 = vld [vmem:[%s205 + $0x628] sm:$0xff]
        %v451 = vld [vmem:[%s205 + $0x630] sm:$0xff]
        %v452 = vld [vmem:[%s205 + $0x638] sm:$0xff]
        %v453 = vld [vmem:[%s205 + $0x640] sm:$0xff]
        %v454 = vld [vmem:[%s205 + $0x648] sm:$0xff]
        %v455 = vld [vmem:[%s205 + $0x650] sm:$0xff]
        %v456 = vld [vmem:[%s205 + $0x658] sm:$0xff]
        %v457 = vld [vmem:[%s205 + $0x660] sm:$0xff]
        %v458 = vld [vmem:[%s205 + $0x668] sm:$0xff]
        %v459 = vld [vmem:[%s205 + $0x670] sm:$0xff]
        %v460 = vld [vmem:[%s205 + $0x678] sm:$0xff]
        %v461 = vld [vmem:[%s205 + $0x680] sm:$0xff]
        %v462 = vld [vmem:[%s205 + $0x688] sm:$0xff]
        %v463 = vld [vmem:[%s205 + $0x690] sm:$0xff]
        %v464 = vld [vmem:[%s205 + $0x698] sm:$0xff]
        %v465 = vld [vmem:[%s205 + $0x6a0] sm:$0xff]
        %v466 = vld [vmem:[%s205 + $0x6a8] sm:$0xff]
        %v467 = vld [vmem:[%s205 + $0x6b0] sm:$0xff]
        %v468 = vld [vmem:[%s205 + $0x6b8] sm:$0xff]
        %v469 = vld [vmem:[%s205 + $0x6c0] sm:$0xff]
        %v470 = vld [vmem:[%s205 + $0x6c8] sm:$0xff]
        %v471 = vld [vmem:[%s205 + $0x6d0] sm:$0xff]
        %v472 = vld [vmem:[%s205 + $0x6d8] sm:$0xff]
        %v473 = vld [vmem:[%s205 + $0x6e0] sm:$0xff]
        %v474 = vld [vmem:[%s205 + $0x6e8] sm:$0xff]
        %v475 = vld [vmem:[%s205 + $0x6f0] sm:$0xff]
        %v476 = vld [vmem:[%s205 + $0x6f8] sm:$0xff]
        %v477 = vld [vmem:[%s205 + $0x700] sm:$0xff]
        %v478 = vld [vmem:[%s205 + $0x708] sm:$0xff]
        %v479 = vld [vmem:[%s205 + $0x710] sm:$0xff]
        %v480 = vld [vmem:[%s205 + $0x718] sm:$0xff]
        %v481 = vld [vmem:[%s205 + $0x720] sm:$0xff]
        %v482 = vld [vmem:[%s205 + $0x728] sm:$0xff]
        %v483 = vld [vmem:[%s205 + $0x730] sm:$0xff]
        %v484 = vld [vmem:[%s205 + $0x738] sm:$0xff]
        %v485 = vld [vmem:[%s205 + $0x740] sm:$0xff]
        %v486 = vld [vmem:[%s205 + $0x748] sm:$0xff]
        %v487 = vld [vmem:[%s205 + $0x750] sm:$0xff]
        %v488 = vld [vmem:[%s205 + $0x758] sm:$0xff]
        %v489 = vld [vmem:[%s205 + $0x760] sm:$0xff]
        %v490 = vld [vmem:[%s205 + $0x768] sm:$0xff]
        %v491 = vld [vmem:[%s205 + $0x770] sm:$0xff]
        %v492 = vld [vmem:[%s205 + $0x778] sm:$0xff]
        %v493 = vld [vmem:[%s205 + $0x780] sm:$0xff]
        %v494 = vld [vmem:[%s205 + $0x788] sm:$0xff]
        %v495 = vld [vmem:[%s205 + $0x790] sm:$0xff]
        %v496 = vld [vmem:[%s205 + $0x798] sm:$0xff]
        %v497 = vld [vmem:[%s205 + $0x7a0] sm:$0xff]
        %v498 = vld [vmem:[%s205 + $0x7a8] sm:$0xff]
        %v499 = vld [vmem:[%s205 + $0x7b0] sm:$0xff]
        %v500 = vld [vmem:[%s205 + $0x7b8] sm:$0xff]
        %v501 = vld [vmem:[%s205 + $0x7c0] sm:$0xff]
        %v502 = vld [vmem:[%s205 + $0x7c8] sm:$0xff]
        %v503 = vld [vmem:[%s205 + $0x7d0] sm:$0xff]
        %v504 = vld [vmem:[%s205 + $0x7d8] sm:$0xff]
        %v505 = vld [vmem:[%s205 + $0x7e0] sm:$0xff]
        %v506 = vld [vmem:[%s205 + $0x7e8] sm:$0xff]
        %v507 = vld [vmem:[%s205 + $0x7f0] sm:$0xff]
        %v508 = vld [vmem:[%s205 + $0x7f8] sm:$0xff]
        %v509 = vld [vmem:[%s214] sm:$0xff]
        %v510 = vld [vmem:[%s214 + $0x8] sm:$0xff]
        %v511 = vld [vmem:[%s214 + $0x10] sm:$0xff]
        %v512 = vld [vmem:[%s214 + $0x18] sm:$0xff]
        %v513 = vld [vmem:[%s214 + $0x20] sm:$0xff]
        %v514 = vld [vmem:[%s214 + $0x28] sm:$0xff]
        %v515 = vld [vmem:[%s214 + $0x30] sm:$0xff]
        %v516 = vld [vmem:[%s214 + $0x38] sm:$0xff]
        %517 = vmatprep.subr.mxu0 %v314
        %518 = vmatpush1.xpose.msra.mxu0 %v313
        %519 = vmatprep.subr.mxu0 %v310
        %520 = vmatpush1.xpose.msra.mxu0 %v309
        %521 = vmatprep.subr.mxu0 %v306
        %522 = vmatpush1.xpose.msra.mxu0 %v305
        %523 = vmatprep.subr.mxu0 %v302
        %524 = vmatpush1.xpose.msra.mxu0 %v301
        %525 = vmatprep.subr.mxu0 %v298
        %526 = vmatpush1.xpose.msra.mxu0 %v297
        %527 = vmatprep.subr.mxu0 %v294
        %528 = vmatpush1.xpose.msra.mxu0 %v293
        %529 = vmatprep.subr.mxu0 %v290
        %530 = vmatpush1.xpose.msra.mxu0 %v289
        %531 = vmatprep.subr.mxu0 %v286
        %532 = vmatpush1.xpose.msra.mxu0 %v285
        %533 = vmatprep.subr.mxu0 %v282
        %534 = vmatpush1.xpose.msra.mxu0 %v281
        %535 = vmatprep.subr.mxu0 %v278
        %536 = vmatpush1.xpose.msra.mxu0 %v277
        %537 = vmatprep.subr.mxu0 %v274
        %538 = vmatpush1.xpose.msra.mxu0 %v273
        %539 = vmatprep.subr.mxu0 %v270
        %540 = vmatpush1.xpose.msra.mxu0 %v269
        %541 = vmatprep.subr.mxu0 %v266
        %542 = vmatpush1.xpose.msra.mxu0 %v265
        %543 = vmatprep.subr.mxu0 %v262
        %544 = vmatpush1.xpose.msra.mxu0 %v261
        %545 = vmatprep.subr.mxu0 %v258
        %546 = vmatpush1.xpose.msra.mxu0 %v257
        %547 = vmatprep.subr.mxu0 %v254
        %548 = vmatpush1.xpose.msra.mxu0 %v253
        %549 = vmatprep.subr.mxu0 %v378
        %550 = vmatpush2.xpose.msra.mxu0 %v377
        %551 = vmatprep.subr.mxu0 %v374
        %552 = vmatpush2.xpose.msra.mxu0 %v373
        %553 = vmatprep.subr.mxu0 %v370
        %554 = vmatpush2.xpose.msra.mxu0 %v369
        %555 = vmatprep.subr.mxu0 %v366
        %556 = vmatpush2.xpose.msra.mxu0 %v365
        %557 = vmatprep.subr.mxu0 %v362
        %558 = vmatpush2.xpose.msra.mxu0 %v361
        %559 = vmatprep.subr.mxu0 %v358
        %560 = vmatpush2.xpose.msra.mxu0 %v357
        %561 = vmatprep.subr.mxu0 %v354
        %562 = vmatpush2.xpose.msra.mxu0 %v353
        %563 = vmatprep.subr.mxu0 %v350
        %564 = vmatpush2.xpose.msra.mxu0 %v349
        %565 = vmatprep.subr.mxu0 %v346
        %566 = vmatpush2.xpose.msra.mxu0 %v345
        %567 = vmatprep.subr.mxu0 %v342
        %568 = vmatpush2.xpose.msra.mxu0 %v341
        %569 = vmatprep.subr.mxu0 %v338
        %570 = vmatpush2.xpose.msra.mxu0 %v337
        %571 = vmatprep.subr.mxu0 %v334
        %572 = vmatpush2.xpose.msra.mxu0 %v333
        %573 = vmatprep.subr.mxu0 %v330
        %574 = vmatpush2.xpose.msra.mxu0 %v329
        %575 = vmatprep.subr.mxu0 %v326
        %576 = vmatpush2.xpose.msra.mxu0 %v325
        %577 = vmatprep.subr.mxu0 %v322
        %578 = vmatpush2.xpose.msra.mxu0 %v321
        %579 = vmatprep.subr.mxu0 %v318
        %580 = vmatpush2.xpose.msra.mxu0 %v317
        %581 = vmatprep.mubr.f32.mxu0 %v246
        %582 = vmatmul.mubr.f32.gmra.mxu0 %v245
        %v583 = vpop.f32.mrf.mxu0
        %v584 = vadd.f32 %v509, %v583
        %v585 = vpop.f32.mrf.mxu0
        %v586 = vadd.f32 %v510, %v585
        %587 = vmatprep.mubr.f32.mxu0 %v250
        %588 = vmatmul.mubr.f32.gmra.mxu0 %v249
        %v589 = vpop.f32.mrf.mxu0
        %v590 = vadd.f32 %v513, %v589
        %v591 = vpop.f32.mrf.mxu0
        %v592 = vadd.f32 %v514, %v591
        %593 = vdwg.mxu0
        %594 = vmatprep.subr.mxu0 %v316
        %595 = vmatpush1.xpose.msra.mxu0 %v315
        %596 = vmatprep.subr.mxu0 %v312
        %597 = vmatpush1.xpose.msra.mxu0 %v311
        %598 = vmatprep.subr.mxu0 %v308
        %599 = vmatpush1.xpose.msra.mxu0 %v307
        %600 = vmatprep.subr.mxu0 %v304
        %601 = vmatpush1.xpose.msra.mxu0 %v303
        %602 = vmatprep.subr.mxu0 %v300
        %603 = vmatpush1.xpose.msra.mxu0 %v299
        %604 = vmatprep.subr.mxu0 %v296
        %605 = vmatpush1.xpose.msra.mxu0 %v295
        %606 = vmatprep.subr.mxu0 %v292
        %607 = vmatpush1.xpose.msra.mxu0 %v291
        %608 = vmatprep.subr.mxu0 %v288
        %609 = vmatpush1.xpose.msra.mxu0 %v287
        %610 = vmatprep.subr.mxu0 %v284
        %611 = vmatpush1.xpose.msra.mxu0 %v283
        %612 = vmatprep.subr.mxu0 %v280
        %613 = vmatpush1.xpose.msra.mxu0 %v279
        %614 = vmatprep.subr.mxu0 %v276
        %615 = vmatpush1.xpose.msra.mxu0 %v275
        %616 = vmatprep.subr.mxu0 %v272
        %617 = vmatpush1.xpose.msra.mxu0 %v271
        %618 = vmatprep.subr.mxu0 %v268
        %619 = vmatpush1.xpose.msra.mxu0 %v267
        %620 = vmatprep.subr.mxu0 %v264
        %621 = vmatpush1.xpose.msra.mxu0 %v263
        %622 = vmatprep.subr.mxu0 %v260
        %623 = vmatpush1.xpose.msra.mxu0 %v259
        %624 = vmatprep.subr.mxu0 %v256
        %625 = vmatpush1.xpose.msra.mxu0 %v255
        %626 = vmatprep.subr.mxu0 %v380
        %627 = vmatpush2.xpose.msra.mxu0 %v379
        %628 = vmatprep.subr.mxu0 %v376
        %629 = vmatpush2.xpose.msra.mxu0 %v375
        %630 = vmatprep.subr.mxu0 %v372
        %631 = vmatpush2.xpose.msra.mxu0 %v371
        %632 = vmatprep.subr.mxu0 %v368
        %633 = vmatpush2.xpose.msra.mxu0 %v367
        %634 = vmatprep.subr.mxu0 %v364
        %635 = vmatpush2.xpose.msra.mxu0 %v363
        %636 = vmatprep.subr.mxu0 %v360
        %637 = vmatpush2.xpose.msra.mxu0 %v359
        %638 = vmatprep.subr.mxu0 %v356
        %639 = vmatpush2.xpose.msra.mxu0 %v355
        %640 = vmatprep.subr.mxu0 %v352
        %641 = vmatpush2.xpose.msra.mxu0 %v351
        %642 = vmatprep.subr.mxu0 %v348
        %643 = vmatpush2.xpose.msra.mxu0 %v347
        %644 = vmatprep.subr.mxu0 %v344
        %645 = vmatpush2.xpose.msra.mxu0 %v343
        %646 = vmatprep.subr.mxu0 %v340
        %647 = vmatpush2.xpose.msra.mxu0 %v339
        %648 = vmatprep.subr.mxu0 %v336
        %649 = vmatpush2.xpose.msra.mxu0 %v335
        %650 = vmatprep.subr.mxu0 %v332
        %651 = vmatpush2.xpose.msra.mxu0 %v331
        %652 = vmatprep.subr.mxu0 %v328
        %653 = vmatpush2.xpose.msra.mxu0 %v327
        %654 = vmatprep.subr.mxu0 %v324
        %655 = vmatpush2.xpose.msra.mxu0 %v323
        %656 = vmatprep.subr.mxu0 %v320
        %657 = vmatpush2.xpose.msra.mxu0 %v319
        %658 = vmatprep.mubr.f32.mxu0 %v248
        %659 = vmatmul.mubr.f32.gmra.mxu0 %v247
        %v660 = vpop.f32.mrf.mxu0
        %v661 = vadd.f32 %v584, %v660
        %v662 = vpop.f32.mrf.mxu0
        %v663 = vadd.f32 %v586, %v662
        %664 = vmatprep.mubr.f32.mxu0 %v252
        %665 = vmatmul.mubr.f32.gmra.mxu0 %v251
        %v666 = vpop.f32.mrf.mxu0
        %v667 = vadd.f32 %v590, %v666
        %v668 = vpop.f32.mrf.mxu0
        %v669 = vadd.f32 %v592, %v668
        %670 = vdwg.mxu0
        %671 = vmatprep.subr.mxu0 %v442
        %672 = vmatpush1.xpose.msra.mxu0 %v441
        %673 = vmatprep.subr.mxu0 %v438
        %674 = vmatpush1.xpose.msra.mxu0 %v437
        %675 = vmatprep.subr.mxu0 %v434
        %676 = vmatpush1.xpose.msra.mxu0 %v433
        %677 = vmatprep.subr.mxu0 %v430
        %678 = vmatpush1.xpose.msra.mxu0 %v429
        %679 = vmatprep.subr.mxu0 %v426
        %680 = vmatpush1.xpose.msra.mxu0 %v425
        %681 = vmatprep.subr.mxu0 %v422
        %682 = vmatpush1.xpose.msra.mxu0 %v421
        %683 = vmatprep.subr.mxu0 %v418
        %684 = vmatpush1.xpose.msra.mxu0 %v417
        %685 = vmatprep.subr.mxu0 %v414
        %686 = vmatpush1.xpose.msra.mxu0 %v413
        %687 = vmatprep.subr.mxu0 %v410
        %688 = vmatpush1.xpose.msra.mxu0 %v409
        %689 = vmatprep.subr.mxu0 %v406
        %690 = vmatpush1.xpose.msra.mxu0 %v405
        %691 = vmatprep.subr.mxu0 %v402
        %692 = vmatpush1.xpose.msra.mxu0 %v401
        %693 = vmatprep.subr.mxu0 %v398
        %694 = vmatpush1.xpose.msra.mxu0 %v397
        %695 = vmatprep.subr.mxu0 %v394
        %696 = vmatpush1.xpose.msra.mxu0 %v393
        %697 = vmatprep.subr.mxu0 %v390
        %698 = vmatpush1.xpose.msra.mxu0 %v389
        %699 = vmatprep.subr.mxu0 %v386
        %700 = vmatpush1.xpose.msra.mxu0 %v385
        %701 = vmatprep.subr.mxu0 %v382
        %702 = vmatpush1.xpose.msra.mxu0 %v381
        %703 = vmatprep.subr.mxu0 %v506
        %704 = vmatpush2.xpose.msra.mxu0 %v505
        %705 = vmatprep.subr.mxu0 %v502
        %706 = vmatpush2.xpose.msra.mxu0 %v501
        %707 = vmatprep.subr.mxu0 %v498
        %708 = vmatpush2.xpose.msra.mxu0 %v497
        %709 = vmatprep.subr.mxu0 %v494
        %710 = vmatpush2.xpose.msra.mxu0 %v493
        %711 = vmatprep.subr.mxu0 %v490
        %712 = vmatpush2.xpose.msra.mxu0 %v489
        %713 = vmatprep.subr.mxu0 %v486
        %714 = vmatpush2.xpose.msra.mxu0 %v485
        %715 = vmatprep.subr.mxu0 %v482
        %716 = vmatpush2.xpose.msra.mxu0 %v481
        %717 = vmatprep.subr.mxu0 %v478
        %718 = vmatpush2.xpose.msra.mxu0 %v477
        %719 = vmatprep.subr.mxu0 %v474
        %720 = vmatpush2.xpose.msra.mxu0 %v473
        %721 = vmatprep.subr.mxu0 %v470
        %722 = vmatpush2.xpose.msra.mxu0 %v469
        %723 = vmatprep.subr.mxu0 %v466
        %724 = vmatpush2.xpose.msra.mxu0 %v465
        %725 = vmatprep.subr.mxu0 %v462
        %726 = vmatpush2.xpose.msra.mxu0 %v461
        %727 = vmatprep.subr.mxu0 %v458
        %728 = vmatpush2.xpose.msra.mxu0 %v457
        %729 = vmatprep.subr.mxu0 %v454
        %730 = vmatpush2.xpose.msra.mxu0 %v453
        %731 = vmatprep.subr.mxu0 %v450
        %732 = vmatpush2.xpose.msra.mxu0 %v449
        %733 = vmatprep.subr.mxu0 %v446
        %734 = vmatpush2.xpose.msra.mxu0 %v445
        %735 = vmatprep.mubr.f32.mxu0 %v246
        %736 = vmatmul.mubr.f32.gmra.mxu0 %v245
        %v737 = vpop.f32.mrf.mxu0
        %v738 = vadd.f32 %v511, %v737
        %v739 = vpop.f32.mrf.mxu0
        %v740 = vadd.f32 %v512, %v739
        %741 = vmatprep.mubr.f32.mxu0 %v250
        %742 = vmatmul.mubr.f32.gmra.mxu0 %v249
        %v743 = vpop.f32.mrf.mxu0
        %v744 = vadd.f32 %v515, %v743
        %v745 = vpop.f32.mrf.mxu0
        %v746 = vadd.f32 %v516, %v745
        %747 = vdwg.mxu0
        %748 = vmatprep.subr.mxu0 %v444
        %749 = vmatpush1.xpose.msra.mxu0 %v443
        %750 = vmatprep.subr.mxu0 %v440
        %751 = vmatpush1.xpose.msra.mxu0 %v439
        %752 = vmatprep.subr.mxu0 %v436
        %753 = vmatpush1.xpose.msra.mxu0 %v435
        %754 = vmatprep.subr.mxu0 %v432
        %755 = vmatpush1.xpose.msra.mxu0 %v431
        %756 = vmatprep.subr.mxu0 %v428
        %757 = vmatpush1.xpose.msra.mxu0 %v427
        %758 = vmatprep.subr.mxu0 %v424
        %759 = vmatpush1.xpose.msra.mxu0 %v423
        %760 = vmatprep.subr.mxu0 %v420
        %761 = vmatpush1.xpose.msra.mxu0 %v419
        %762 = vmatprep.subr.mxu0 %v416
        %763 = vmatpush1.xpose.msra.mxu0 %v415
        %764 = vmatprep.subr.mxu0 %v412
        %765 = vmatpush1.xpose.msra.mxu0 %v411
        %766 = vmatprep.subr.mxu0 %v408
        %767 = vmatpush1.xpose.msra.mxu0 %v407
        %768 = vmatprep.subr.mxu0 %v404
        %769 = vmatpush1.xpose.msra.mxu0 %v403
        %770 = vmatprep.subr.mxu0 %v400
        %771 = vmatpush1.xpose.msra.mxu0 %v399
        %772 = vmatprep.subr.mxu0 %v396
        %773 = vmatpush1.xpose.msra.mxu0 %v395
        %774 = vmatprep.subr.mxu0 %v392
        %775 = vmatpush1.xpose.msra.mxu0 %v391
        %776 = vmatprep.subr.mxu0 %v388
        %777 = vmatpush1.xpose.msra.mxu0 %v387
        %778 = vmatprep.subr.mxu0 %v384
        %779 = vmatpush1.xpose.msra.mxu0 %v383
        %780 = vmatprep.subr.mxu0 %v508
        %781 = vmatpush2.xpose.msra.mxu0 %v507
        %782 = vmatprep.subr.mxu0 %v504
        %783 = vmatpush2.xpose.msra.mxu0 %v503
        %784 = vmatprep.subr.mxu0 %v500
        %785 = vmatpush2.xpose.msra.mxu0 %v499
        %786 = vmatprep.subr.mxu0 %v496
        %787 = vmatpush2.xpose.msra.mxu0 %v495
        %788 = vmatprep.subr.mxu0 %v492
        %789 = vmatpush2.xpose.msra.mxu0 %v491
        %790 = vmatprep.subr.mxu0 %v488
        %791 = vmatpush2.xpose.msra.mxu0 %v487
        %792 = vmatprep.subr.mxu0 %v484
        %793 = vmatpush2.xpose.msra.mxu0 %v483
        %794 = vmatprep.subr.mxu0 %v480
        %795 = vmatpush2.xpose.msra.mxu0 %v479
        %796 = vmatprep.subr.mxu0 %v476
        %797 = vmatpush2.xpose.msra.mxu0 %v475
        %798 = vmatprep.subr.mxu0 %v472
        %799 = vmatpush2.xpose.msra.mxu0 %v471
        %800 = vmatprep.subr.mxu0 %v468
        %801 = vmatpush2.xpose.msra.mxu0 %v467
        %802 = vmatprep.subr.mxu0 %v464
        %803 = vmatpush2.xpose.msra.mxu0 %v463
        %804 = vmatprep.subr.mxu0 %v460
        %805 = vmatpush2.xpose.msra.mxu0 %v459
        %806 = vmatprep.subr.mxu0 %v456
        %807 = vmatpush2.xpose.msra.mxu0 %v455
        %808 = vmatprep.subr.mxu0 %v452
        %809 = vmatpush2.xpose.msra.mxu0 %v451
        %810 = vmatprep.subr.mxu0 %v448
        %811 = vmatpush2.xpose.msra.mxu0 %v447
        %812 = vmatprep.mubr.f32.mxu0 %v248
        %813 = vmatmul.mubr.f32.gmra.mxu0 %v247
        %v814 = vpop.f32.mrf.mxu0
        %v815 = vadd.f32 %v738, %v814
        %v816 = vpop.f32.mrf.mxu0
        %v817 = vadd.f32 %v740, %v816
        %818 = vmatprep.mubr.f32.mxu0 %v252
        %819 = vmatmul.mubr.f32.gmra.mxu0 %v251
        %v820 = vpop.f32.mrf.mxu0
        %v821 = vadd.f32 %v744, %v820
        %v822 = vpop.f32.mrf.mxu0
        %v823 = vadd.f32 %v746, %v822
        %824 = vdwg.mxu0
        %825 = vst [vmem:[%s241] sm:$0xff] %v661
        %826 = vst [vmem:[%s241 + $0x8] sm:$0xff] %v663
        %827 = vst [vmem:[%s241 + $0x10] sm:$0xff] %v815
        %828 = vst [vmem:[%s241 + $0x18] sm:$0xff] %v817
        %829 = vst [vmem:[%s241 + $0x20] sm:$0xff] %v667
        %830 = vst [vmem:[%s241 + $0x28] sm:$0xff] %v669
        %831 = vst [vmem:[%s241 + $0x30] sm:$0xff] %v821
        %832 = vst [vmem:[%s241 + $0x38] sm:$0xff] %v823
        %s833 = sand.u32 %s102, 1
        %s834 = scalar_lea.sflag [#allocation4], %s833
        %s835 = sand.u32 %s102, 1
        %s836 = smul.addr %s835, 64
        %s837 = scalar_lea.vmem [#allocation8], %s836
        // Predicated region
        $region45: #{tpu_custom_call.1} parent=31 // pred_check
          %p838 = pneg %p112
        $region46: #{tpu_custom_call.1} parent=31 // pred_check_branch
          %840 = sbr.rel (%p838) target = $region48
        $region47: #{tpu_custom_call.1} parent=31 // pred_region
          %s841 = smul.u32 4, %s21
          %s843 = ssub.s32 1024, 1024
          %844 = vsyncadd %s834, %s843
          %s845 = smul.addr %s841, 128
          %s846 = scalar_lea.hbm %s3, %s845
          %s847 = sshll.u32 %s837, 4
          %s848 = int_to_ptr.vmem [resolvable:$true] %s847
          %853 = dma.vmem_to_hbm [thread:$0]  %s848, 1024, %s846, %s834, 512, 1024, 32
        $region48: #{tpu_custom_call.1} parent=31 // pred_fallthru
          _
      $region32: #{tpu_custom_call.1} parent=5 // pred_fallthru
        _
      %p854 = scmp.le.s32.totalorder 2, %s16
      // Predicated region
      $region49: #{tpu_custom_call.1} parent=5 // pred_check
        %p855 = pneg %p854
      $region50: #{tpu_custom_call.1} parent=5 // pred_check_branch
        %857 = sbr.rel (%p855) target = $region52
      $region51: #{tpu_custom_call.1} parent=5 // pred_region
        %s858 = ssub.s32 %s16, 2
        // Predicated region
        $region53: #{tpu_custom_call.1} parent=51 // pred_check
          %p859 = pneg %p118
        $region54: #{tpu_custom_call.1} parent=51 // pred_check_branch
          %861 = sbr.rel (%p859) target = $region56
        $region55: #{tpu_custom_call.1} parent=51 // pred_region
          %s862 = sand.u32 %s103, 1
          %s863 = scalar_lea.sflag [#allocation4], %s862
          %s864 = sand.u32 %s103, 1
          %s865 = smul.addr %s864, 64
          %s866 = scalar_lea.vmem [#allocation8], %s865
          %867 = dma.done %s863, 1024
        $region56: #{tpu_custom_call.1} parent=51 // pred_fallthru
          _
      $region52: #{tpu_custom_call.1} parent=5 // pred_fallthru
        _
    $region6: #{tpu_custom_call.1} parent=1 // loop_footer
      %s20 = sadd.s32 1, %s16
    $region7: #{tpu_custom_call.1} parent=1 // loop_footer_branch
      %15 = sbr.rel target = $region3
    $region8: #{tpu_custom_call.1} parent=1 // loop_exit
      _
    %868 = vsyncpa [#allocation3], 1
    %s869 = scalar_lea.sflag [#allocation3], 1
    %870 = vsyncpa %s869, 1
    %871 = vsyncpa [#allocation6], 1
    %s872 = scalar_lea.sflag [#allocation6], 1
    %873 = vsyncpa %s872, 1
    %874 = vsyncpa [#allocation4], 1
    %s875 = scalar_lea.sflag [#allocation4], 1
    %876 = vsyncpa %s875, 1

</llo_original>
